<compile_context>
chip_gen: v7x
topology: tpu7x:2x2x1
jax: 0.10.0
libtpu: 0.0.40
codegen_flags: <defaults>
</compile_context>

<pallas_src>
import functools

import jax
import jax.numpy as jnp
from jax.experimental import pallas as pl
from jax.experimental.pallas import tpu as pltpu

_LANE = 128
# ~2 MiB per input block (4096 f32 rows x 128 lanes, 8192 for bf16).  With
# 2 inputs x 2 pipeline buffers plus elementwise temporaries this stays well
# inside the scoped-VMEM request below on every generation (incl. v7x).
_TARGET_BLOCK_BYTES = 2 * 1024 * 1024
_VMEM_LIMIT_BYTES = 40 * 1024 * 1024


def _pdmse_kernel(pred_ref, label_ref, out_ref, acc_ref, *,
                  block_rows, cols, rows, n_blocks, steps_per_slice,
                  subdiv, needs_mask):
    i = pl.program_id(1)  # reduction step within this slice

    @pl.when(i == 0)
    def _init():
        acc_ref[...] = jnp.zeros_like(acc_ref)

    p = pred_ref[...].astype(jnp.float32)
    l = label_ref[...].astype(jnp.float32)
    w = jnp.where(l > 0, jnp.float32(10.0), jnp.float32(1.0))
    d = p - l
    contrib = w * d * d  # (block_rows, cols) f32

    def _accumulate(x):
        if subdiv > 1:
            # Keep the running sum vreg-sized: fold the block onto an
            # (8, cols) accumulator with pure VPU adds (layout-preserving
            # reshape; no big accumulator loads/stores on the hot path).
            acc_ref[...] += jnp.sum(x.reshape(-1, subdiv, cols), axis=0)
        else:
            acc_ref[...] += jnp.sum(x, axis=0, keepdims=True)

    if needs_mask:
        c = pl.program_id(0)
        blk = c * steps_per_slice + i
        # Only the last real block (or a clamped spare step) can contain rows
        # past the end of the array; all other steps skip the mask work.
        is_edge = blk >= n_blocks - 1

        @pl.when(is_edge)
        def _edge():
            start = blk * block_rows
            row_ids = jax.lax.broadcasted_iota(jnp.int32, (block_rows, cols), 0)
            valid = (start + row_ids) < rows
            _accumulate(jnp.where(valid, contrib, jnp.float32(0.0)))

        @pl.when(jnp.logical_not(is_edge))
        def _interior():
            _accumulate(contrib)
    else:
        _accumulate(contrib)

    @pl.when(i == pl.num_programs(1) - 1)
    def _finalize():
        out_ref[...] = acc_ref[...].reshape(1, subdiv, cols)


def _view_2d(pred, label):
    """Copy-free 2-D views of both inputs (same decision for both).

    Preference order:
      1. size % 128 == 0        -> (size // 128, 128)      exact lanes, free
      2. reasonable last dim    -> (size // last, last)     full-extent lanes, free
      3. fallback (rare)        -> lane-pad to 128 (only degenerate shapes)
    """
    n = pred.size
    if n % _LANE == 0:
        shape2d = (n // _LANE, _LANE)
        return pred.reshape(shape2d), label.reshape(shape2d)

    c = int(pred.shape[-1]) if pred.ndim >= 1 else 1
    itemsize = max(pred.dtype.itemsize, label.dtype.itemsize)
    if c >= 64 and c * itemsize * 32 <= _TARGET_BLOCK_BYTES:
        shape2d = (n // c, c)
        return pred.reshape(shape2d), label.reshape(shape2d)

    # TODO(synk): degenerate shapes (tiny or huge ragged last dim) still pad.
    pad = (-n) % _LANE
    p = jnp.pad(pred.reshape(-1), (0, pad)).reshape(-1, _LANE)
    l = jnp.pad(label.reshape(-1), (0, pad)).reshape(-1, _LANE)
    return p, l


def _leading_dim_semantics():
    # v7x has two TensorCores per chip; CORE_PARALLEL shards the leading
    # (slice) grid axis across them.  Other generations keep the standard
    # "parallel" annotation (megacore chips already split on it).
    try:
        kind = jax.devices()[0].device_kind.lower()
    except Exception:
        kind = ""
    if ("v7" in kind) or ("tpu7" in kind) or ("7x" in kind):
        return pltpu.CORE_PARALLEL
    return pltpu.PARALLEL


def pdmse_loss(prediction, label):
    """mean(mask * (prediction - label)**2) with mask = 10 where label > 0."""
    assert prediction.shape == label.shape, (prediction.shape, label.shape)
    n_elems = prediction.size
    if n_elems == 0:
        return jnp.float32(jnp.nan)  # torch.mean of an empty tensor is nan

    p2, l2 = _view_2d(prediction, label)
    rows, cols = p2.shape

    # Block sizing: ~_TARGET_BLOCK_BYTES per input block, rounded to the
    # sublane-packing multiple of the widest input dtype.
    itemsize = max(prediction.dtype.itemsize, label.dtype.itemsize)
    row_mult = 8 * (4 // itemsize) if itemsize in (1, 2, 4) else 8
    target_rows = (_TARGET_BLOCK_BYTES // (cols * itemsize)) // row_mult * row_mult
    target_rows = max(row_mult, target_rows)
    block_rows = rows if rows <= target_rows else target_rows
    n_blocks = pl.cdiv(rows, block_rows)

    # Two reduction slices so a 2-TensorCore chip (v7x) can stream HBM with
    # both cores; single-core chips just run the slices back to back.
    num_slices = 2 if n_blocks >= 2 else 1
    steps_per_slice = pl.cdiv(n_blocks, num_slices)
    clamp_needed = num_slices * steps_per_slice != n_blocks
    needs_mask = clamp_needed or (rows % block_rows != 0)

    subdiv = 8 if (block_rows % 8 == 0 and cols % _LANE == 0) else 1

    def in_map(c, i):
        blk = c * steps_per_slice + i
        if clamp_needed:
            # The spare step of the last slice re-reads a valid block; its
            # contribution is masked to exactly zero inside the kernel.
            blk = jnp.minimum(blk, n_blocks - 1)
        return (blk, 0)

    kernel = functools.partial(
        _pdmse_kernel,
        block_rows=block_rows,
        cols=cols,
        rows=rows,
        n_blocks=n_blocks,
        steps_per_slice=steps_per_slice,
        subdiv=subdiv,
        needs_mask=needs_mask,
    )

    partials = pl.pallas_call(
        kernel,
        out_shape=jax.ShapeDtypeStruct((num_slices, subdiv, cols), jnp.float32),
        grid_spec=pltpu.PrefetchScalarGridSpec(
            num_scalar_prefetch=0,
            grid=(num_slices, steps_per_slice),
            in_specs=[
                pl.BlockSpec((block_rows, cols), in_map),
                pl.BlockSpec((block_rows, cols), in_map),
            ],
            out_specs=pl.BlockSpec((1, subdiv, cols), lambda c, i: (c, 0, 0)),
            scratch_shapes=[pltpu.VMEM((subdiv, cols), jnp.float32)],
        ),
        compiler_params=pltpu.CompilerParams(
            dimension_semantics=(_leading_dim_semantics(), pltpu.ARBITRARY),
            vmem_limit_bytes=_VMEM_LIMIT_BYTES,
        ),
    )(p2, l2)

    # Tiny final reduction of per-slice / per-sublane / per-lane partials,
    # then mean normalization (1/N computed in double precision on host).
    return jnp.sum(partials) * (1.0 / float(n_elems))


if __name__ == "__main__":
    key = jax.random.PRNGKey(0)

    def _check(shape, k):
        kp, kl = jax.random.split(k)
        prediction = jax.random.normal(kp, shape, dtype=jnp.float32)
        label = jax.random.normal(kl, shape, dtype=jnp.float32)
        loss = jax.block_until_ready(pdmse_loss(prediction, label))
        mask = jnp.where(label > 0, 10.0, 1.0)
        ref = jnp.mean(mask * (prediction - label) ** 2)
        assert jnp.allclose(loss, ref, rtol=1e-5, atol=1e-6), (shape, loss, ref)

    k1, k2 = jax.random.split(key)
    # Primary small case (lane-aligned size).
    _check((2, 4, 16, 16), k1)
    # Unaligned element count: exercises the copy-free full-extent-lane view,
    # the two-slice split, and the pl.when-gated edge-block row mask.
    _check((3, 7, 173, 181), k2)

    print("KERNEL_OK")
</pallas_src>

<mosaic_0001>
module attributes {stable_mosaic.version = 11 : i64} {
  func.func @_pdmse_kernel(%arg0: i32, %arg1: i32, %arg2: memref<16x128xf32, #tpu.memory_space<vmem>>, %arg3: memref<16x128xf32, #tpu.memory_space<vmem>>, %arg4: memref<1x8x128xf32, #tpu.memory_space<vmem>>, %arg5: memref<8x128xf32, #tpu.memory_space<vmem>>) attributes {dimension_semantics = [#tpu.dimension_semantics<parallel>, #tpu.dimension_semantics<arbitrary>], iteration_bounds = array<i64: 1, 1>, scalar_prefetch = 0 : i64, scratch_operands = 1 : i64, tpu.core_type = #tpu.core_type<tc>, window_params = [{transform_indices = @transform_0, window_bounds = array<i64: 16, 128>}, {transform_indices = @transform_1, window_bounds = array<i64: 16, 128>}, {transform_indices = @transform_2, window_bounds = array<i64: 1, 8, 128>}]} {
    %c0_i32 = arith.constant 0 : i32
    %0 = arith.cmpi eq, %arg1, %c0_i32 : i32
    %1 = arith.extui %0 : i1 to i32
    %c0_i32_0 = arith.constant 0 : i32
    %2 = arith.cmpi ne, %1, %c0_i32_0 : i32
    scf.if %2 {
      %cst_13 = arith.constant 0.000000e+00 : f32
      %21 = vector.broadcast %cst_13 : f32 to vector<8x128xf32>
      %c0_14 = arith.constant 0 : index
      %c0_15 = arith.constant 0 : index
      %22 = vector.load %arg5[%c0_14, %c0_15] : memref<8x128xf32, #tpu.memory_space<vmem>>, vector<8x128xf32>
      tpu.vector_store %arg5[%c0_14, %c0_15], %21 {strides = array<i32>} : memref<8x128xf32, #tpu.memory_space<vmem>>, vector<8x128xf32>,
    } else {
    }
    %c0 = arith.constant 0 : index
    %c0_1 = arith.constant 0 : index
    %3 = vector.load %arg2[%c0, %c0_1] : memref<16x128xf32, #tpu.memory_space<vmem>>, vector<16x128xf32>
    %c0_2 = arith.constant 0 : index
    %c0_3 = arith.constant 0 : index
    %4 = vector.load %arg3[%c0_2, %c0_3] : memref<16x128xf32, #tpu.memory_space<vmem>>, vector<16x128xf32>
    %cst = arith.constant 0.000000e+00 : f32
    %5 = vector.broadcast %cst : f32 to vector<16x128xf32>
    %6 = arith.cmpf ogt, %4, %5 : vector<16x128xf32>
    %cst_4 = arith.constant 1.000000e+01 : f32
    %cst_5 = arith.constant 1.000000e+00 : f32
    %7 = vector.broadcast %cst_4 : f32 to vector<16x128xf32>
    %8 = vector.broadcast %cst_5 : f32 to vector<16x128xf32>
    %9 = arith.select %6, %7, %8 : vector<16x128xi1>, vector<16x128xf32>
    %10 = arith.subf %3, %4 : vector<16x128xf32>
    %11 = arith.mulf %9, %10 : vector<16x128xf32>
    %12 = arith.mulf %11, %10 : vector<16x128xf32>
    %c0_6 = arith.constant 0 : index
    %c0_7 = arith.constant 0 : index
    %13 = vector.load %arg5[%c0_6, %c0_7] : memref<8x128xf32, #tpu.memory_space<vmem>>, vector<8x128xf32>
    %14 = vector.shape_cast %12 : vector<16x128xf32> to vector<2x8x128xf32>
    %cst_8 = arith.constant dense<0.000000e+00> : vector<8x128xf32>
    %15 = vector.multi_reduction <add>, %14, %cst_8 [0] : vector<2x8x128xf32> to vector<8x128xf32>
    %16 = arith.addf %13, %15 : vector<8x128xf32>
    %c0_9 = arith.constant 0 : index
    %c0_10 = arith.constant 0 : index
    %17 = vector.load %arg5[%c0_9, %c0_10] : memref<8x128xf32, #tpu.memory_space<vmem>>, vector<8x128xf32>
    tpu.vector_store %arg5[%c0_9, %c0_10], %16 {strides = array<i32>} : memref<8x128xf32, #tpu.memory_space<vmem>>, vector<8x128xf32>,
    %c0_i32_11 = arith.constant 0 : i32
    %18 = arith.cmpi eq, %arg1, %c0_i32_11 : i32
    %19 = arith.extui %18 : i1 to i32
    %c0_i32_12 = arith.constant 0 : i32
    %20 = arith.cmpi ne, %19, %c0_i32_12 : i32
    scf.if %20 {
      %c0_13 = arith.constant 0 : index
      %c0_14 = arith.constant 0 : index
      %21 = vector.load %arg5[%c0_13, %c0_14] : memref<8x128xf32, #tpu.memory_space<vmem>>, vector<8x128xf32>
      %22 = vector.shape_cast %21 : vector<8x128xf32> to vector<1x8x128xf32>
      %c0_15 = arith.constant 0 : index
      %c0_16 = arith.constant 0 : index
      %c0_17 = arith.constant 0 : index
      %23 = vector.load %arg4[%c0_15, %c0_16, %c0_17] : memref<1x8x128xf32, #tpu.memory_space<vmem>>, vector<1x8x128xf32>
      tpu.vector_store %arg4[%c0_15, %c0_16, %c0_17], %22 {strides = array<i32>} : memref<1x8x128xf32, #tpu.memory_space<vmem>>, vector<1x8x128xf32>,
    } else {
    }
    return
  }
  func.func @transform_0(%arg0: i32, %arg1: i32) -> (i32, i32) {
    %c1_i32 = arith.constant 1 : i32
    %0 = arith.muli %arg0, %c1_i32 : i32
    %1 = arith.addi %0, %arg1 : i32
    %c0_i32 = arith.constant 0 : i32
    %c0_i32_0 = arith.constant 0 : i32
    return %1, %c0_i32 : i32, i32
  }
  func.func @transform_1(%arg0: i32, %arg1: i32) -> (i32, i32) {
    %c1_i32 = arith.constant 1 : i32
    %0 = arith.muli %arg0, %c1_i32 : i32
    %1 = arith.addi %0, %arg1 : i32
    %c0_i32 = arith.constant 0 : i32
    %c0_i32_0 = arith.constant 0 : i32
    return %1, %c0_i32 : i32, i32
  }
  func.func @transform_2(%arg0: i32, %arg1: i32) -> (i32, i32, i32) {
    %c0_i32 = arith.constant 0 : i32
    %c0_i32_0 = arith.constant 0 : i32
    %c0_i32_1 = arith.constant 0 : i32
    return %arg0, %c0_i32, %c0_i32_0 : i32, i32, i32
  }
}

</mosaic_0001>

<llo_original>
// kernel: tpu_custom_call.1
$region0: #{tpu_custom_call.1}
  #allocation0 [shape = 'u32[]', space=smem, size = 0x4, offset = 0x4, fixed_abs, tag = 'smem constant byte address 0x4 - core index']
  #allocation1 [shape = 'u32[144,128]{1,0:T(1,128)}', space=vmem, size = 0x12000, scoped, tag = 'internal scratch']
  #allocation2 [shape = 'f32[8,128]{1,0:T(8,128)}', space=vmem, size = 0x1000, scoped, tag = 'scratch operand']
  %s0 = inlined_call_operand.hbm [shape: f32[16,128], index: 0, kind: input, shape index: {}]
  %s1 = inlined_call_operand.hbm [shape: f32[16,128], index: 1, kind: input, shape index: {}]
  %s2 = inlined_call_operand.hbm [shape: f32[1,8,128], index: 2, kind: output, shape index: {}]
  %s3 = sld [smem:[#allocation0]]
  $region34: #{tpu_custom_call.1} parent=0
    _
  %s5 = ssub.s32 1, %s3
  %s6 = scalar_select 0, %s5, %s3
  $region1: #{tpu_custom_call.1} parent=0
    #allocation3 [shape = 'u8[8192]{0}', space=vmem, size = 0x2000, scoped, tag = 'input window, operand 0, single buffered']
    #allocation4 [shape = 's32[1]{0}', space=sflag, size = 0x4, scoped, tag = 'scoped memory for tpu_custom_call.1']
    #allocation5 [shape = 's32[1]{0}', space=sflag, size = 0x4, scoped, tag = 'scoped memory for tpu_custom_call.1']
    #allocation6 [shape = 'u8[8192]{0}', space=vmem, size = 0x2000, scoped, tag = 'input window, operand 1, single buffered']
    #allocation7 [shape = 's32[1]{0}', space=sflag, size = 0x4, scoped, tag = 'scoped memory for tpu_custom_call.1']
    #allocation8 [shape = 'u8[4096]{0}', space=vmem, size = 0x1000, scoped, tag = 'output window, operand 0, single buffered']
    %7 = vsyncpa [#allocation4], 0
    %8 = vsyncpa [#allocation7], 0
    %9 = vsyncpa [#allocation5], 0
    // Predicated region
    $region2: #{tpu_custom_call.1} parent=1 // pred_check
      _
    $region3: #{tpu_custom_call.1} parent=1 // pred_check_branch
      %11 = sbr.rel (0) target = $region5
    $region4: #{tpu_custom_call.1} parent=1 // pred_region
      %s12 = sadd.s32 0, 0
      %s13 = smul.u32 2, %s12
      %s15 = ssub.s32 256, 256
      %16 = vsyncadd [#allocation4], %s15
      %s17 = smul.addr %s13, 128
      %s18 = scalar_lea.hbm %s0, %s17
      %s19 = sshll.u32 [#allocation3], 4
      %s20 = int_to_ptr.vmem [resolvable:$true] %s19
      %25 = dma.hbm_to_vmem [thread:$0]  %s18, 256, %s20, [#allocation4], 128, 128, 8
    $region5: #{tpu_custom_call.1} parent=1 // pred_fallthru
      _
    // Predicated region
    $region6: #{tpu_custom_call.1} parent=1 // pred_check
      _
    $region7: #{tpu_custom_call.1} parent=1 // pred_check_branch
      %27 = sbr.rel (0) target = $region9
    $region8: #{tpu_custom_call.1} parent=1 // pred_region
      %s28 = sadd.s32 0, 0
      %s29 = smul.u32 2, %s28
      %s31 = ssub.s32 256, 256
      %32 = vsyncadd [#allocation7], %s31
      %s33 = smul.addr %s29, 128
      %s34 = scalar_lea.hbm %s1, %s33
      %s35 = sshll.u32 [#allocation6], 4
      %s36 = int_to_ptr.vmem [resolvable:$true] %s35
      %41 = dma.hbm_to_vmem [thread:$0]  %s34, 256, %s36, [#allocation7], 128, 128, 8
    $region9: #{tpu_custom_call.1} parent=1 // pred_fallthru
      _
    // Predicated region
    $region10: #{tpu_custom_call.1} parent=1 // pred_check
      _
    $region11: #{tpu_custom_call.1} parent=1 // pred_check_branch
      %43 = sbr.rel (0) target = $region13
    $region12: #{tpu_custom_call.1} parent=1 // pred_region
      %44 = dma.done [#allocation4], 256
    $region13: #{tpu_custom_call.1} parent=1 // pred_fallthru
      _
    // Predicated region
    $region14: #{tpu_custom_call.1} parent=1 // pred_check
      _
    $region15: #{tpu_custom_call.1} parent=1 // pred_check_branch
      %46 = sbr.rel (0) target = $region17
    $region16: #{tpu_custom_call.1} parent=1 // pred_region
      %47 = dma.done [#allocation7], 256
    $region17: #{tpu_custom_call.1} parent=1 // pred_fallthru
      _
    %s48 = sadd.s32 0, 0
    %s49 = smul.u32 2, %s48
    %s50 = sadd.s32 0, 0
    %s51 = smul.u32 2, %s50
    %p52 = scmp.eq.s32.totalorder 0, 0
    // Predicated region
    $region18: #{tpu_custom_call.1} parent=1 // pred_check
      %p53 = pneg %p52
    $region19: #{tpu_custom_call.1} parent=1 // pred_check_branch
      %55 = sbr.rel (%p53) target = $region21
    $region20: #{tpu_custom_call.1} parent=1 // pred_region
      %56 = vst [vmem:[#allocation2] sm:$0xff] 0.0
    $region21: #{tpu_custom_call.1} parent=1 // pred_fallthru
      _
    %v57 = vld [vmem:[#allocation3] sm:$0xff]
    %v58 = vld [vmem:[#allocation3 + $0x8] sm:$0xff]
    %v59 = vld [vmem:[#allocation6] sm:$0xff]
    %v60 = vld [vmem:[#allocation6 + $0x8] sm:$0xff]
    %vm61 = vcmp.gt.f32.partialorder %v59, 0.0
    %vm62 = vcmp.gt.f32.partialorder %v60, 0.0
    %v63 = vsel %vm61, 10.0, 1.0
    %v64 = vsel %vm62, 10.0, 1.0
    %v65 = vsub.f32 %v57, %v59
    %v66 = vsub.f32 %v58, %v60
    %v67 = vmul.f32 %v63, %v65
    %v68 = vmul.f32 %v64, %v66
    %v69 = vmul.f32 %v67, %v65
    %v70 = vmul.f32 %v68, %v66
    %v71 = vld [vmem:[#allocation2] sm:$0xff]
    %v72 = vadd.f32 %v69, %v70
    %v73 = vadd.f32 %v71, %v72
    %74 = vst [vmem:[#allocation2] sm:$0xff] %v73
    // Predicated region
    $region22: #{tpu_custom_call.1} parent=1 // pred_check
      %p75 = pneg %p52
    $region23: #{tpu_custom_call.1} parent=1 // pred_check_branch
      %77 = sbr.rel (%p75) target = $region25
    $region24: #{tpu_custom_call.1} parent=1 // pred_region
      %v78 = vld [vmem:[#allocation2] sm:$0xff]
      %79 = vst [vmem:[#allocation8] sm:$0xff] %v78
    $region25: #{tpu_custom_call.1} parent=1 // pred_fallthru
      _
    // Predicated region
    $region26: #{tpu_custom_call.1} parent=1 // pred_check
      _
    $region27: #{tpu_custom_call.1} parent=1 // pred_check_branch
      %81 = sbr.rel (0) target = $region29
    $region28: #{tpu_custom_call.1} parent=1 // pred_region
      %s83 = ssub.s32 128, 128
      %84 = vsyncadd [#allocation5], %s83
      %s86 = sshll.u32 [#allocation8], 4
      %s87 = int_to_ptr.vmem [resolvable:$true] %s86
      %89 = dma.vmem_to_hbm [thread:$0]  %s87, 128, %s2, [#allocation5]
    $region29: #{tpu_custom_call.1} parent=1 // pred_fallthru
      _
    // Predicated region
    $region30: #{tpu_custom_call.1} parent=1 // pred_check
      _
    $region31: #{tpu_custom_call.1} parent=1 // pred_check_branch
      %91 = sbr.rel (0) target = $region33
    $region32: #{tpu_custom_call.1} parent=1 // pred_region
      %92 = dma.done [#allocation5], 128
    $region33: #{tpu_custom_call.1} parent=1 // pred_fallthru
      _
    %93 = vsyncpa [#allocation4], 1
    %94 = vsyncpa [#allocation7], 1
    %95 = vsyncpa [#allocation5], 1

</llo_original>
